<compile_context>
chip_gen: v7x
topology: tpu7x:2x2x1
jax: 0.10.0
libtpu: 0.0.40
codegen_flags: <defaults>
</compile_context>

<pallas_src>
import functools

import numpy as np
import jax
import jax.numpy as jnp
from jax.experimental import pallas as pl
from jax.experimental.pallas import tpu as pltpu


def _ts_decay_linear_kernel(x_ref, o_ref, *, window, weights):
    """x_ref: (TB, T, TF) input slab; o_ref: (TB, S_dense, TF) output slab."""
    s = o_ref.shape[1]  # number of dense (stride-1) window starts
    # W is small -> fully unrolled shifted FMAs on the VPU, f32 accumulator.
    acc = weights[0] * x_ref[:, 0:s, :].astype(jnp.float32)
    for j in range(1, window):
        acc = acc + weights[j] * x_ref[:, j:j + s, :].astype(jnp.float32)
    o_ref[...] = acc.astype(o_ref.dtype)


def _pick_f_tile(F, T, itemsize, budget_bytes):
    if F % 128 != 0:
        return F  # not 128-divisible: must use the full (untiled) dim
    for tf in (512, 384, 256, 128):
        if F % tf == 0 and T * tf * itemsize <= budget_bytes:
            return tf
    return 128


def _pick_b_tile(B, T, s_dense, tf, itemsize, budget_bytes, max_tb):
    for d in range(min(B, max_tb), 0, -1):
        if B % d == 0 and d * (T + s_dense) * tf * itemsize <= budget_bytes:
            return d
    return 1


def ts_decay_linear(x, window=5, strides=1):
    """Pallas implementation of the PyTorch ts_decay_linear forward pass.

    x: (B, T, F) float array.  Returns (B, F, S).
    """
    B, T, F = x.shape
    if T < window:
        raise ValueError(f"t_num ({T}) must be >= window ({window})")

    # Window start positions, exactly mirroring the PyTorch iter_list logic.
    starts = list(range(0, T - window + 1, strides))
    if (T - window) not in starts:
        starts.append(T - window)
    s_dense = T - window + 1  # all stride-1 window positions

    # Normalized linear-decay weights: (j+1) / (W*(W+1)/2), as static scalars.
    denom = window * (window + 1) / 2.0
    weights = tuple(float(j + 1) / denom for j in range(window))

    itemsize = x.dtype.itemsize
    budget = 4 << 20  # per-block VMEM budget (bytes)
    TF = _pick_f_tile(F, T, itemsize, budget)
    nf = F // TF
    # Keep >=2 grid blocks when possible so v7x can shard across its 2 TCs.
    max_tb = B if (nf >= 2 or B < 2) else max(1, B // 2)
    TB = _pick_b_tile(B, T, s_dense, TF, itemsize, budget, max_tb)

    block_bytes = TB * (T + s_dense) * TF * itemsize
    vmem_limit = int(max(32 << 20, min(64 << 20, 4 * block_bytes + (4 << 20))))

    dense = pl.pallas_call(
        functools.partial(_ts_decay_linear_kernel, window=window, weights=weights),
        out_shape=jax.ShapeDtypeStruct((B, s_dense, F), x.dtype),
        grid=(B // TB, nf),
        in_specs=[pl.BlockSpec((TB, T, TF), lambda bi, fi: (bi, 0, fi))],
        out_specs=pl.BlockSpec((TB, s_dense, TF), lambda bi, fi: (bi, 0, fi)),
        compiler_params=pltpu.CompilerParams(
            dimension_semantics=("parallel", "parallel"),
            vmem_limit_bytes=vmem_limit,
        ),
    )(x)

    if strides == 1:
        sel = dense  # starts == [0, 1, ..., T-W]: no selection needed
    else:
        # TODO(synk): for large strides, do the strided window read inside the
        # kernel (pl.ds with stride) instead of computing every dense position.
        sel = dense[:, jnp.asarray(starts, dtype=jnp.int32), :]

    return jnp.transpose(sel, (0, 2, 1))  # (B, F, S)


def _reference(x, window=5, strides=1):
    # Pure-JAX reference mirroring the PyTorch module exactly.
    B, T, F = x.shape
    starts = list(range(0, T - window + 1, strides))
    if (T - window) not in starts:
        starts.append(T - window)
    num = (jnp.arange(window, dtype=jnp.float32) + 1.0).reshape(-1, 1)
    coe = jnp.tile(num, (1, F))                                  # (W, F)
    sum_days = jnp.tile(jnp.sum(coe, axis=0).reshape(-1, F), (window, 1))
    coe_n = coe / sum_days
    outs = []
    for k in starts:
        data = x[:, k:window + k, :].astype(jnp.float32)         # (B, W, F)
        outs.append(jnp.sum(coe_n[None] * data, axis=1))         # (B, F)
    out = jnp.stack(outs, axis=1)                                # (B, S, F)
    return jnp.transpose(out, (0, 2, 1)).astype(x.dtype)         # (B, F, S)


if __name__ == "__main__":
    key = jax.random.PRNGKey(0)
    B, T, F = 2, 16, 256
    window, strides = 5, 1
    x = jax.random.normal(key, (B, T, F), dtype=jnp.float32)

    out = ts_decay_linear(x, window=window, strides=strides)
    out = jax.block_until_ready(out)

    ref = _reference(x, window=window, strides=strides)
    assert out.shape == ref.shape, (out.shape, ref.shape)
    np.testing.assert_allclose(np.asarray(out), np.asarray(ref),
                               rtol=1e-5, atol=1e-5)
    print("KERNEL_OK")
</pallas_src>

<mosaic_0001>
module attributes {stable_mosaic.version = 11 : i64} {
  func.func @_ts_decay_linear_kernel(%arg0: i32, %arg1: i32, %arg2: memref<1x16x256xf32, #tpu.memory_space<vmem>>, %arg3: memref<1x12x256xf32, #tpu.memory_space<vmem>>) attributes {dimension_semantics = [#tpu.dimension_semantics<parallel>, #tpu.dimension_semantics<parallel>], iteration_bounds = array<i64: 2, 1>, scalar_prefetch = 0 : i64, scratch_operands = 0 : i64, tpu.core_type = #tpu.core_type<tc>, window_params = [{transform_indices = @transform_0, window_bounds = array<i64: 1, 16, 256>}, {transform_indices = @transform_1, window_bounds = array<i64: 1, 12, 256>}]} {
    %c0 = arith.constant 0 : index
    %c0_0 = arith.constant 0 : index
    %c0_1 = arith.constant 0 : index
    %0 = vector.load %arg2[%c0, %c0_0, %c0_1] : memref<1x16x256xf32, #tpu.memory_space<vmem>>, vector<1x12x256xf32>
    %cst = arith.constant 0.0666666701 : f32
    %1 = vector.broadcast %cst : f32 to vector<1x12x256xf32>
    %2 = arith.mulf %1, %0 : vector<1x12x256xf32>
    %c0_2 = arith.constant 0 : index
    %c1 = arith.constant 1 : index
    %c0_3 = arith.constant 0 : index
    %3 = vector.load %arg2[%c0_2, %c1, %c0_3] : memref<1x16x256xf32, #tpu.memory_space<vmem>>, vector<1x12x256xf32>
    %cst_4 = arith.constant 0.13333334 : f32
    %4 = vector.broadcast %cst_4 : f32 to vector<1x12x256xf32>
    %5 = arith.mulf %4, %3 : vector<1x12x256xf32>
    %6 = arith.addf %2, %5 : vector<1x12x256xf32>
    %c0_5 = arith.constant 0 : index
    %c2 = arith.constant 2 : index
    %c0_6 = arith.constant 0 : index
    %7 = vector.load %arg2[%c0_5, %c2, %c0_6] : memref<1x16x256xf32, #tpu.memory_space<vmem>>, vector<1x12x256xf32>
    %cst_7 = arith.constant 2.000000e-01 : f32
    %8 = vector.broadcast %cst_7 : f32 to vector<1x12x256xf32>
    %9 = arith.mulf %8, %7 : vector<1x12x256xf32>
    %10 = arith.addf %6, %9 : vector<1x12x256xf32>
    %c0_8 = arith.constant 0 : index
    %c3 = arith.constant 3 : index
    %c0_9 = arith.constant 0 : index
    %11 = vector.load %arg2[%c0_8, %c3, %c0_9] : memref<1x16x256xf32, #tpu.memory_space<vmem>>, vector<1x12x256xf32>
    %cst_10 = arith.constant 0.266666681 : f32
    %12 = vector.broadcast %cst_10 : f32 to vector<1x12x256xf32>
    %13 = arith.mulf %12, %11 : vector<1x12x256xf32>
    %14 = arith.addf %10, %13 : vector<1x12x256xf32>
    %c0_11 = arith.constant 0 : index
    %c4 = arith.constant 4 : index
    %c0_12 = arith.constant 0 : index
    %15 = vector.load %arg2[%c0_11, %c4, %c0_12] : memref<1x16x256xf32, #tpu.memory_space<vmem>>, vector<1x12x256xf32>
    %cst_13 = arith.constant 0.333333343 : f32
    %16 = vector.broadcast %cst_13 : f32 to vector<1x12x256xf32>
    %17 = arith.mulf %16, %15 : vector<1x12x256xf32>
    %18 = arith.addf %14, %17 : vector<1x12x256xf32>
    %c0_14 = arith.constant 0 : index
    %c0_15 = arith.constant 0 : index
    %c0_16 = arith.constant 0 : index
    %19 = vector.load %arg3[%c0_14, %c0_15, %c0_16] : memref<1x12x256xf32, #tpu.memory_space<vmem>>, vector<1x12x256xf32>
    tpu.vector_store %arg3[%c0_14, %c0_15, %c0_16], %18 {strides = array<i32>} : memref<1x12x256xf32, #tpu.memory_space<vmem>>, vector<1x12x256xf32>,
    return
  }
  func.func @transform_0(%arg0: i32, %arg1: i32) -> (i32, i32, i32) {
    %c0_i32 = arith.constant 0 : i32
    %c0_i32_0 = arith.constant 0 : i32
    return %arg0, %c0_i32, %arg1 : i32, i32, i32
  }
  func.func @transform_1(%arg0: i32, %arg1: i32) -> (i32, i32, i32) {
    %c0_i32 = arith.constant 0 : i32
    %c0_i32_0 = arith.constant 0 : i32
    return %arg0, %c0_i32, %arg1 : i32, i32, i32
  }
}

</mosaic_0001>

<llo_original>
// kernel: tpu_custom_call.1
$region0: #{tpu_custom_call.1}
  #allocation0 [shape = 'u32[]', space=smem, size = 0x4, offset = 0x4, fixed_abs, tag = 'smem constant byte address 0x4 - core index']
  #allocation1 [shape = 'u32[144,128]{1,0:T(1,128)}', space=vmem, size = 0x12000, scoped, tag = 'internal scratch']
  %s0 = inlined_call_operand.hbm [shape: f32[2,16,256], index: 0, kind: input, shape index: {}]
  %s1 = inlined_call_operand.vmem [shape: f32[2,12,256], index: 1, kind: output, shape index: {}]
  %s2 = sld [smem:[#allocation0]]
  $region41: #{tpu_custom_call.1} parent=0
    _
  %s4 = ssub.s32 1, %s2
  %s5 = scalar_select 0, %s4, %s2
  $region1: #{tpu_custom_call.1} parent=0
    #allocation2 [shape = 'u8[32768]{0}', space=vmem, size = 0x8000, scoped, tag = 'input window, operand 0']
    #allocation3 [shape = 's32[2]{0}', space=sflag, size = 0x8, scoped, tag = 'scoped memory for tpu_custom_call.1']
    %6 = vsyncpa [#allocation3], 0
    %s7 = scalar_lea.sflag [#allocation3], 1
    %8 = vsyncpa %s7, 0
    loop: start=0, step=1, limit=4
    $region2: #{tpu_custom_call.1} parent=1 // loop_pre_header
      _
    $region3: #{tpu_custom_call.1} parent=1 // loop_header
      %s10 = sphi 0, %s14
      %p11 = scmp.ge.s32.totalorder %s10, 4
      %s17 = sphi 0, %s29
      %s18 = sphi 0, %s25
      %s19 = sphi 0, %s17
      %s20 = sphi 0, %s18
      %s21 = sphi 0, %s19
      %s22 = sphi 0, %s20
      %s34 = sphi 0, %s36
      %s37 = sphi 0, %s34
      %s38 = sphi 0, %s37
      %s54 = sphi 0, %s38
      %s62 = sphi 0, %s64
      %s65 = sphi 0, %s62
      %s66 = sphi 0, %s65
      %s82 = sphi 0, %s66
    $region4: #{tpu_custom_call.1} parent=1 // loop_header_branch
      %13 = sbr.rel (%p11) target = $region8
    $region5: #{tpu_custom_call.1} parent=1 // loop_body
      %s15 = ssub.s32 %s10, 1
      %s16 = ssub.s32 %s10, 2
      %s23 = sadd.s32 1, %s18
      %p24 = scmp.ge.s32.totalorder %s23, 1
      %s25 = scalar_select %p24, 0, %s23
      %s26 = sadd.s32 1, %s17
      %s27 = scalar_select %p24, %s26, %s17
      %p28 = scmp.ge.s32.totalorder %s27, 2
      %s29 = scalar_select %p28, 0, %s27
      %s30 = ssub.s32 %s17, %s29
      %s31 = ssub.s32 %s18, %s25
      %s32 = sor.u32 %s30, %s31
      %p33 = scmp.eq.s32.totalorder %s32, 0
      %s35 = sadd.s32 %s34, 1
      %s36 = scalar_select %p33, %s34, %s35
      %p39 = pneg %p33
      %p40 = scmp.eq.s32.totalorder %s10, 1
      %p41 = por %p39, %p40
      %p42 = scmp.ne.s32.totalorder %s34, %s37
      %p43 = scmp.eq.s32.totalorder %s10, 0
      %p44 = por %p42, %p43
      %p45 = scmp.ne.s32.totalorder %s34, %s37
      %p46 = scmp.eq.s32.totalorder %s15, 1
      %p47 = por %p45, %p46
      %p48 = scmp.ne.s32.totalorder %s37, %s38
      %p49 = scmp.eq.s32.totalorder %s15, 0
      %p50 = por %p48, %p49
      %p51 = scmp.ne.s32.totalorder %s37, %s38
      %p52 = scmp.eq.s32.totalorder %s16, 1
      %p53 = por %p51, %p52
      %p55 = scmp.ne.s32.totalorder %s38, %s54
      %p56 = scmp.eq.s32.totalorder %s16, 0
      %p57 = por %p55, %p56
      %s58 = ssub.s32 %s17, %s29
      %s59 = ssub.s32 %s18, %s25
      %s60 = sor.u32 %s58, %s59
      %p61 = scmp.eq.s32.totalorder %s60, 0
      %s63 = sadd.s32 %s62, 1
      %s64 = scalar_select %p61, %s62, %s63
      %p67 = pneg %p61
      %p68 = scmp.eq.s32.totalorder %s10, 1
      %p69 = por %p67, %p68
      %p70 = scmp.ne.s32.totalorder %s62, %s65
      %p71 = scmp.eq.s32.totalorder %s10, 0
      %p72 = por %p70, %p71
      %p73 = scmp.ne.s32.totalorder %s62, %s65
      %p74 = scmp.eq.s32.totalorder %s15, 1
      %p75 = por %p73, %p74
      %p76 = scmp.ne.s32.totalorder %s65, %s66
      %p77 = scmp.eq.s32.totalorder %s15, 0
      %p78 = por %p76, %p77
      %p79 = scmp.ne.s32.totalorder %s65, %s66
      %p80 = scmp.eq.s32.totalorder %s16, 1
      %p81 = por %p79, %p80
      %p83 = scmp.ne.s32.totalorder %s66, %s82
      %p84 = scmp.eq.s32.totalorder %s16, 0
      %p85 = por %p83, %p84
      %p86 = scmp.le.s32.totalorder 1, %s10
      %p87 = scmp.lt.s32.totalorder %s10, 3
      %p88 = pnand %p86, %p87
      %p89 = pneg %p88
      // Predicated region
      $region9: #{tpu_custom_call.1} parent=5 // pred_check
        _
      $region10: #{tpu_custom_call.1} parent=5 // pred_check_branch
        %91 = sbr.rel (%p88) target = $region12
      $region11: #{tpu_custom_call.1} parent=5 // pred_region
        %s92 = ssub.s32 %s10, 1
      $region12: #{tpu_custom_call.1} parent=5 // pred_fallthru
        _
      %p93 = scmp.lt.s32.totalorder %s10, 2
      // Predicated region
      $region13: #{tpu_custom_call.1} parent=5 // pred_check
        %p94 = pneg %p93
      $region14: #{tpu_custom_call.1} parent=5 // pred_check_branch
        %96 = sbr.rel (%p94) target = $region16
      $region15: #{tpu_custom_call.1} parent=5 // pred_region
        // Predicated region
        $region17: #{tpu_custom_call.1} parent=15 // pred_check
          %p97 = pneg %p44
        $region18: #{tpu_custom_call.1} parent=15 // pred_check_branch
          %99 = sbr.rel (%p97) target = $region20
        $region19: #{tpu_custom_call.1} parent=15 // pred_region
          %s100 = sand.u32 %s34, 1
          %s101 = scalar_lea.sflag [#allocation3], %s100
          %s102 = sand.u32 %s34, 1
          %s103 = smul.addr %s102, 32
          %s104 = scalar_lea.vmem [#allocation2], %s103
          %s105 = smul.u32 2, %s18
          %s107 = ssub.s32 512, 512
          %108 = vsyncadd %s101, %s107
          %s109 = smul.addr %s17, 4
          %s110 = sadd.s32 %s105, %s109
          %s111 = smul.addr %s110, 128
          %s112 = scalar_lea.hbm %s0, %s111
          %s113 = sshll.u32 %s104, 4
          %s114 = int_to_ptr.vmem [resolvable:$true] %s113
          %119 = dma.hbm_to_vmem [thread:$0]  %s112, 512, %s114, %s101, 256, 256, 16
        $region20: #{tpu_custom_call.1} parent=15 // pred_fallthru
          _
      $region16: #{tpu_custom_call.1} parent=5 // pred_fallthru
        _
      %p120 = scmp.le.s32.totalorder 1, %s10
      %p121 = scmp.lt.s32.totalorder %s10, 3
      %p122 = pnand %p120, %p121
      %p123 = pneg %p122
      // Predicated region
      $region21: #{tpu_custom_call.1} parent=5 // pred_check
        _
      $region22: #{tpu_custom_call.1} parent=5 // pred_check_branch
        %125 = sbr.rel (%p122) target = $region24
      $region23: #{tpu_custom_call.1} parent=5 // pred_region
        %s126 = ssub.s32 %s10, 1
        %s127 = sand.u32 %s37, 1
        %s128 = scalar_lea.sflag [#allocation3], %s127
        %s129 = sand.u32 %s37, 1
        %s130 = smul.addr %s129, 32
        %s131 = scalar_lea.vmem [#allocation2], %s130
        // Predicated region
        $region25: #{tpu_custom_call.1} parent=23 // pred_check
          %p132 = pneg %p50
        $region26: #{tpu_custom_call.1} parent=23 // pred_check_branch
          %134 = sbr.rel (%p132) target = $region28
        $region27: #{tpu_custom_call.1} parent=23 // pred_region
          %135 = dma.done %s128, 512
        $region28: #{tpu_custom_call.1} parent=23 // pred_fallthru
          _
        %s136 = sand.u32 %s37, 1
        %s137 = scalar_lea.sflag [#allocation3], %s136
        %s138 = sand.u32 %s37, 1
        %s139 = smul.addr %s138, 32
        %s140 = scalar_lea.vmem [#allocation2], %s139
        %p141 = pneg %p50
        %p142 = pneg %p47
        %p143 = pneg %p78
        %p144 = pneg %p75
        %s145 = smul.u32 2, %s20
        %p146 = scmp.lt.s32.totalorder %s19, 1
        %s147 = scalar_select %p146, %s19, 1
        %p148 = scmp.lt.s32.totalorder %s145, 1
        %s149 = scalar_select %p148, %s145, 1
        %s150 = smul.addr %s147, 4
        %s151 = sadd.s32 %s149, %s150
        %s152 = smul.addr %s151, 8
        %s153 = scalar_lea.vmem %s1, %s152
        %s154 = smul.u32 2, %s20
        %s155 = smul.u32 2, %s20
        %p156 = scmp.lt.s32.totalorder %s19, 1
        %s157 = scalar_select %p156, %s19, 1
        %p158 = scmp.lt.s32.totalorder %s155, 1
        %s159 = scalar_select %p158, %s155, 1
        %s160 = smul.addr %s157, 4
        %s161 = sadd.s32 %s159, %s160
        %s162 = smul.addr %s161, 8
        %s163 = scalar_lea.vmem %s1, %s162
        %s164 = smul.u32 2, %s20
        %v165 = vld [vmem:[%s131] sm:$0xff]
        %v166 = vld [vmem:[%s131 + $0x8] sm:$0xff]
        %v167 = vld [vmem:[%s131 + $0x10] sm:$0xf]
        %v168 = vld [vmem:[%s131 + $0x18] sm:$0xf]
        %v169 = vmul.f32 %v165, 0.06666667
        %v170 = vmul.f32 %v166, 0.06666667
        %v171 = vmul.f32 %v167, 0.06666667
        %v172 = vmul.f32 %v168, 0.06666667
        %v173 = vld [vmem:[%s131] sm:$0xfe]
        %v174 = vld [vmem:[%s131 + $0x8] sm:$0xfe]
        %v175 = vld [vmem:[%s131 + $0x10] sm:$0x1f]
        %v176 = vld [vmem:[%s131 + $0x18] sm:$0x1f]
        %v177 = vmul.f32 %v173, 0.13333334
        %v178 = vmul.f32 %v174, 0.13333334
        %v179 = vmul.f32 %v175, 0.13333334
        %v180 = vmul.f32 %v176, 0.13333334
        %vm185 = vcmask 1046528
        %v186 = vrot.slane %v177, 1
        %v187 = vrot.slane %v179, 1
        %v188 = vsel %vm185, %v186, %v187
        %v189 = vrot.slane %v178, 1
        %v190 = vrot.slane %v180, 1
        %v191 = vsel %vm185, %v189, %v190
        %v196 = vadd.f32 %v169, %v188
        %v197 = vadd.f32 %v170, %v191
        %v198 = vadd.f32 %v171, %v187
        %v199 = vadd.f32 %v172, %v190
        %v200 = vld [vmem:[%s131] sm:$0xfc]
        %v201 = vld [vmem:[%s131 + $0x8] sm:$0xfc]
        %v202 = vld [vmem:[%s131 + $0x10] sm:$0x3f]
        %v203 = vld [vmem:[%s131 + $0x18] sm:$0x3f]
        %v204 = vmul.f32 %v200, 0.2
        %v205 = vmul.f32 %v201, 0.2
        %v206 = vmul.f32 %v202, 0.2
        %v207 = vmul.f32 %v203, 0.2
        %vm212 = vcmask 1045504
        %v213 = vrot.slane %v204, 2
        %v214 = vrot.slane %v206, 2
        %v215 = vsel %vm212, %v213, %v214
        %v216 = vrot.slane %v205, 2
        %v217 = vrot.slane %v207, 2
        %v218 = vsel %vm212, %v216, %v217
        %v223 = vadd.f32 %v196, %v215
        %v224 = vadd.f32 %v197, %v218
        %v225 = vadd.f32 %v198, %v214
        %v226 = vadd.f32 %v199, %v217
        %v227 = vld [vmem:[%s131] sm:$0xf8]
        %v228 = vld [vmem:[%s131 + $0x8] sm:$0xf8]
        %v229 = vld [vmem:[%s131 + $0x10] sm:$0x7f]
        %v230 = vld [vmem:[%s131 + $0x18] sm:$0x7f]
        %v231 = vmul.f32 %v227, 0.26666668
        %v232 = vmul.f32 %v228, 0.26666668
        %v233 = vmul.f32 %v229, 0.26666668
        %v234 = vmul.f32 %v230, 0.26666668
        %vm239 = vcmask 1044480
        %v240 = vrot.slane %v231, 3
        %v241 = vrot.slane %v233, 3
        %v242 = vsel %vm239, %v240, %v241
        %v243 = vrot.slane %v232, 3
        %v244 = vrot.slane %v234, 3
        %v245 = vsel %vm239, %v243, %v244
        %v250 = vadd.f32 %v223, %v242
        %v251 = vadd.f32 %v224, %v245
        %v252 = vadd.f32 %v225, %v241
        %v253 = vadd.f32 %v226, %v244
        %v254 = vld [vmem:[%s131] sm:$0xf0]
        %v255 = vld [vmem:[%s131 + $0x8] sm:$0xf0]
        %v256 = vld [vmem:[%s131 + $0x10] sm:$0xff]
        %v257 = vld [vmem:[%s131 + $0x18] sm:$0xff]
        %v258 = vmul.f32 %v254, 0.33333334
        %v259 = vmul.f32 %v255, 0.33333334
        %v260 = vmul.f32 %v256, 0.33333334
        %v261 = vmul.f32 %v257, 0.33333334
        %vm266 = vcmask 1043456
        %v267 = vrot.slane %v258, 4
        %v268 = vrot.slane %v260, 4
        %v269 = vsel %vm266, %v267, %v268
        %v270 = vrot.slane %v259, 4
        %v271 = vrot.slane %v261, 4
        %v272 = vsel %vm266, %v270, %v271
        %v277 = vadd.f32 %v250, %v269
        %v278 = vadd.f32 %v251, %v272
        %v279 = vadd.f32 %v252, %v268
        %v280 = vadd.f32 %v253, %v271
        %281 = vst [vmem:[%s163] sm:$0xff] %v277
        %282 = vst [vmem:[%s163 + $0x8] sm:$0xff] %v278
        %283 = vst [vmem:[%s163 + $0x10] sm:$0xf] %v279
        %284 = vst [vmem:[%s163 + $0x18] sm:$0xf] %v280
        %s285 = smul.u32 2, %s20
        %p286 = scmp.lt.s32.totalorder %s19, 1
        %s287 = scalar_select %p286, %s19, 1
        %p288 = scmp.lt.s32.totalorder %s285, 1
        %s289 = scalar_select %p288, %s285, 1
        %s290 = smul.addr %s287, 4
        %s291 = sadd.s32 %s289, %s290
        %s292 = smul.addr %s291, 8
        %s293 = scalar_lea.vmem %s1, %s292
        // Predicated region
        $region29: #{tpu_custom_call.1} parent=23 // pred_check
          %p294 = pneg %p75
        $region30: #{tpu_custom_call.1} parent=23 // pred_check_branch
          %296 = sbr.rel (%p294) target = $region32
        $region31: #{tpu_custom_call.1} parent=23 // pred_region
          %s297 = smul.u32 2, %s20
        $region32: #{tpu_custom_call.1} parent=23 // pred_fallthru
          _
      $region24: #{tpu_custom_call.1} parent=5 // pred_fallthru
        _
      %p298 = scmp.le.s32.totalorder 2, %s10
      // Predicated region
      $region33: #{tpu_custom_call.1} parent=5 // pred_check
        %p299 = pneg %p298
      $region34: #{tpu_custom_call.1} parent=5 // pred_check_branch
        %301 = sbr.rel (%p299) target = $region36
      $region35: #{tpu_custom_call.1} parent=5 // pred_region
        %s302 = ssub.s32 %s10, 2
        // Predicated region
        $region37: #{tpu_custom_call.1} parent=35 // pred_check
          %p303 = pneg %p81
        $region38: #{tpu_custom_call.1} parent=35 // pred_check_branch
          %305 = sbr.rel (%p303) target = $region40
        $region39: #{tpu_custom_call.1} parent=35 // pred_region
          %s306 = smul.u32 2, %s22
          %p307 = scmp.lt.s32.totalorder %s21, 1
          %s308 = scalar_select %p307, %s21, 1
          %p309 = scmp.lt.s32.totalorder %s306, 1
          %s310 = scalar_select %p309, %s306, 1
          %s311 = smul.addr %s308, 4
          %s312 = sadd.s32 %s310, %s311
          %s313 = smul.addr %s312, 8
          %s314 = scalar_lea.vmem %s1, %s313
        $region40: #{tpu_custom_call.1} parent=35 // pred_fallthru
          _
      $region36: #{tpu_custom_call.1} parent=5 // pred_fallthru
        _
    $region6: #{tpu_custom_call.1} parent=1 // loop_footer
      %s14 = sadd.s32 1, %s10
    $region7: #{tpu_custom_call.1} parent=1 // loop_footer_branch
      %9 = sbr.rel target = $region3
    $region8: #{tpu_custom_call.1} parent=1 // loop_exit
      _
    %315 = vsyncpa [#allocation3], 1
    %s316 = scalar_lea.sflag [#allocation3], 1
    %317 = vsyncpa %s316, 1

</llo_original>
